<compile_context>
chip_gen: v7x
topology: tpu7x:2x2x1
jax: 0.10.0
libtpu: 0.0.40
codegen_flags: <defaults>
</compile_context>

<pallas_src>
import functools

import jax
import jax.numpy as jnp
from jax.experimental import pallas as pl
from jax.experimental.pallas import tpu as pltpu

_LANES = 128


# --------------------------------------------------------------------------- #
# One-time parameter preparation (hoisted out of the per-call path).
# --------------------------------------------------------------------------- #
def prepare_qkv_params(wk, bk, wq, bq, wv, bv, param_dtype=None):
    """Build the fused QKV weight/bias once (layer init / constants under jit).

    w*: (F, F) in nn.Linear layout (out, in); b*: (F,).
    Returns:
      w_qkv: (F, 3*Fp) — [Wq^T*scale | Wk^T | Wv^T], out-dims zero-padded to Fp
      b_qkv: (1, 3*Fp) — [bq*scale   | bk   | bv  ], zero-padded to Fp
    Padded columns are exactly zero so the score contraction and attn@V are
    mathematically unchanged.  Pass param_dtype=jnp.bfloat16 (with bf16 x) for
    the v6e/v7x MXU-throughput win.
    """
    F = wq.shape[1]
    Fp = max(_LANES, ((F + _LANES - 1) // _LANES) * _LANES)
    scale = 1.0 / jnp.sqrt(jnp.float32(F))          # folded into the Q projection

    def pad_proj(w, b, s=None):
        w_t = w.T if s is None else w.T * s
        b_p = b if s is None else b * s
        w_pad = jnp.zeros((F, Fp), w.dtype).at[:, :F].set(w_t)
        b_pad = jnp.zeros((Fp,), b.dtype).at[:F].set(b_p)
        return w_pad, b_pad

    wq_t, bq_p = pad_proj(wq, bq, scale)
    wk_t, bk_p = pad_proj(wk, bk)
    wv_t, bv_p = pad_proj(wv, bv)

    w_qkv = jnp.concatenate([wq_t, wk_t, wv_t], axis=1)              # (F, 3*Fp)
    b_qkv = jnp.concatenate([bq_p, bk_p, bv_p]).reshape(1, 3 * Fp)   # (1, 3*Fp)
    if param_dtype is not None:
        w_qkv = w_qkv.astype(param_dtype)
        b_qkv = b_qkv.astype(param_dtype)
    return w_qkv, b_qkv


# --------------------------------------------------------------------------- #
# Kernel
# --------------------------------------------------------------------------- #
def _self_attention_kernel(x_ref, w_ref, b_ref, *rest, fp, has_mask):
    if has_mask:
        mask_ref, o_ref = rest
    else:
        (o_ref,) = rest

    Bt, S, F = x_ref.shape

    # ---- fused Q/K/V projection: one wide MXU matmul, f32 accumulate -------
    w = w_ref[...]
    b = b_ref[...]
    if S % 8 == 0:
        # (Bt, S) merges into the sublane dim for free -> more MXU M-rows.
        x2 = x_ref[...].reshape(Bt * S, F)
        qkv = (jnp.dot(x2, w, preferred_element_type=jnp.float32) + b)
        qkv = qkv.reshape(Bt, S, 3 * fp)
    else:
        # reshape would materialize a VMEM copy when S % 8 != 0.
        qkv = jnp.einsum("bsf,fo->bso", x_ref[...], w,
                         preferred_element_type=jnp.float32) + b

    q = qkv[:, :, 0 * fp:1 * fp]      # 1/sqrt(F) already folded into Wq / bq
    k = qkv[:, :, 1 * fp:2 * fp]
    v = qkv[:, :, 2 * fp:3 * fp]

    # ---- attention ----------------------------------------------------------
    # Contraction over the last dims; no explicit transpose (keeps XLU idle).
    scores = jnp.einsum("bqd,bkd->bqk", q, k,
                        preferred_element_type=jnp.float32)          # (Bt,S,S)
    if has_mask:
        scores = jnp.where(mask_ref[...] == 0, jnp.float32(-1e9), scores)

    # Numerically-stable softmax over the key axis (f32 VPU, EUP reciprocal).
    m = jnp.max(scores, axis=-1, keepdims=True)
    e = jnp.exp(scores - m)
    denom = jnp.sum(e, axis=-1, keepdims=True)
    attn = e * pl.reciprocal(denom, approx=True)

    out = jnp.einsum("bqk,bkd->bqd", attn.astype(v.dtype), v,
                     preferred_element_type=jnp.float32)             # (Bt,S,Fp)

    # Unpadded store: masked vst for small F, naturally lane-dense if F%128==0.
    o_ref[...] = out[:, :, :o_ref.shape[-1]].astype(o_ref.dtype)


# --------------------------------------------------------------------------- #
# Wrapper
# --------------------------------------------------------------------------- #
def _pick_block_b(B, S, target_rows=256):
    """Largest divisor of B with block_b*S <= target_rows (fills MXU M-rows),
    preferring >= 2 grid steps so megacore / v7x's 2 TensorCores both get work."""
    max_bb = max(1, target_rows // max(S, 1))
    best = 1
    for cand in range(1, B + 1):
        if B % cand == 0 and cand <= max_bb:
            best = cand
    if B > 1 and B // best == 1:
        for cand in range(best - 1, 0, -1):
            if B % cand == 0 and B // cand >= 2:
                best = cand
                break
    return best


def self_attention_pallas(x, w_qkv, b_qkv, mask=None):
    """x: (B, S, F); w_qkv/b_qkv from prepare_qkv_params(); mask broadcastable
    to (B, S, S), entries == 0 are masked out (as in the PyTorch layer)."""
    B, S, F = x.shape
    Fp = w_qkv.shape[1] // 3
    block_b = _pick_block_b(B, S)
    grid = (B // block_b,)
    has_mask = mask is not None

    kernel = functools.partial(_self_attention_kernel, fp=Fp, has_mask=has_mask)

    in_specs = [
        pl.BlockSpec((block_b, S, F), lambda b: (b, 0, 0)),    # x
        # Constant index_map: fused weight/bias blocks are never re-fetched.
        pl.BlockSpec((F, 3 * Fp), lambda b: (0, 0)),           # fused W
        pl.BlockSpec((1, 3 * Fp), lambda b: (0, 0)),           # fused b
    ]
    args = [x, w_qkv, b_qkv]
    mask_bytes = 0
    if has_mask:
        mask = jnp.broadcast_to(mask, (B, S, S)).astype(jnp.int32)
        in_specs.append(pl.BlockSpec((block_b, S, S), lambda b: (b, 0, 0)))
        args.append(mask)
        mask_bytes = mask.size * mask.dtype.itemsize

    # Advisory cost estimate for XLA's scheduler around the custom call.
    flops = 2 * B * S * F * (3 * Fp) + 2 * (2 * B * S * S * Fp)
    bytes_accessed = (x.size * x.dtype.itemsize
                      + w_qkv.size * w_qkv.dtype.itemsize
                      + b_qkv.size * b_qkv.dtype.itemsize
                      + B * S * F * x.dtype.itemsize
                      + mask_bytes)
    cost = pl.CostEstimate(flops=flops, transcendentals=B * S * S,
                           bytes_accessed=bytes_accessed)

    # Explicit VMEM budget: per-step blocks (double-buffered) + f32 intermediates
    # (qkv, scores/attn, out), with 2x headroom, floored at 32 MiB and capped
    # below v7x's 64 MiB physical per-core VMEM.
    isz = x.dtype.itemsize
    blk_bytes = (block_b * S * F * isz                       # x block
                 + F * 3 * Fp * w_qkv.dtype.itemsize         # fused W
                 + 3 * Fp * b_qkv.dtype.itemsize             # fused b
                 + block_b * S * F * isz                     # out block
                 + (block_b * S * S * 4 if has_mask else 0)) # mask block
    interm = (block_b * S * 3 * Fp * 4        # qkv (f32)
              + 2 * block_b * S * S * 4       # scores + attn (f32)
              + block_b * S * Fp * 4)         # out acc (f32)
    vmem_limit = int(min(max(2 * (2 * blk_bytes + interm), 32 * 1024 * 1024),
                         56 * 1024 * 1024))

    return pl.pallas_call(
        kernel,
        out_shape=jax.ShapeDtypeStruct((B, S, F), x.dtype),
        grid_spec=pltpu.PrefetchScalarGridSpec(
            num_scalar_prefetch=0,
            grid=grid,
            in_specs=in_specs,
            out_specs=pl.BlockSpec((block_b, S, F), lambda b: (b, 0, 0)),
        ),
        compiler_params=pltpu.CompilerParams(
            dimension_semantics=("parallel",),
            vmem_limit_bytes=vmem_limit),
        cost_estimate=cost,
    )(*args)


# --------------------------------------------------------------------------- #
# Plain-JAX reference matching the PyTorch forward.
# --------------------------------------------------------------------------- #
def _reference_jax(x, wk, bk, wq, bq, wv, bv, mask=None):
    keys = x @ wk.T + bk
    queries = x @ wq.T + bq
    values = x @ wv.T + bv
    F = x.shape[-1]
    scores = (queries @ jnp.swapaxes(keys, -2, -1)) / jnp.sqrt(jnp.float32(F))
    if mask is not None:
        scores = jnp.where(mask == 0, -1e9, scores)
    attn = jax.nn.softmax(scores, axis=-1)
    return attn @ values


if __name__ == "__main__":
    B, S, F = 2, 8, 32   # batch, seq, feature_size

    key = jax.random.PRNGKey(0)
    k_x, k_wk, k_bk, k_wq, k_bq, k_wv, k_bv, k_m = jax.random.split(key, 8)

    # Deterministic parameter init (nn.Linear-like scale: U(-1/sqrt(F), 1/sqrt(F)))
    bound = 1.0 / jnp.sqrt(jnp.float32(F))
    x = jax.random.normal(k_x, (B, S, F), dtype=jnp.float32)
    wk = jax.random.uniform(k_wk, (F, F), jnp.float32, -bound, bound)
    bk = jax.random.uniform(k_bk, (F,), jnp.float32, -bound, bound)
    wq = jax.random.uniform(k_wq, (F, F), jnp.float32, -bound, bound)
    bq = jax.random.uniform(k_bq, (F,), jnp.float32, -bound, bound)
    wv = jax.random.uniform(k_wv, (F, F), jnp.float32, -bound, bound)
    bv = jax.random.uniform(k_bv, (F,), jnp.float32, -bound, bound)

    # One-time weight prep (layer init); NOT part of the per-call path.
    w_qkv, b_qkv = prepare_qkv_params(wk, bk, wq, bq, wv, bv)
    w_qkv, b_qkv = jax.block_until_ready((w_qkv, b_qkv))

    # mask=None path (default forward).
    out = jax.block_until_ready(self_attention_pallas(x, w_qkv, b_qkv))
    ref = _reference_jax(x, wk, bk, wq, bq, wv, bv)
    assert out.shape == (B, S, F)
    # Tolerance accounts for the EUP approximate reciprocal in the softmax.
    assert jnp.allclose(out, ref, atol=2e-3, rtol=2e-3), "mismatch vs reference"

    # masked path (matches masked_fill(mask == 0, -1e9)).
    mask = (jax.random.uniform(k_m, (B, S, S)) > 0.3).astype(jnp.int32)
    out_m = jax.block_until_ready(self_attention_pallas(x, w_qkv, b_qkv, mask=mask))
    ref_m = _reference_jax(x, wk, bk, wq, bq, wv, bv, mask=mask)
    assert jnp.allclose(out_m, ref_m, atol=2e-3, rtol=2e-3), "masked mismatch"

    print("KERNEL_OK")
</pallas_src>

<mosaic_0001>
module attributes {stable_mosaic.version = 11 : i64} {
  func.func @_self_attention_kernel(%arg0: i32, %arg1: memref<1x8x32xf32, #tpu.memory_space<vmem>>, %arg2: memref<32x384xf32, #tpu.memory_space<vmem>>, %arg3: memref<1x384xf32, #tpu.memory_space<vmem>>, %arg4: memref<1x8x32xf32, #tpu.memory_space<vmem>>) attributes {dimension_semantics = [#tpu.dimension_semantics<parallel>], iteration_bounds = array<i64: 2>, scalar_prefetch = 0 : i64, scratch_operands = 0 : i64, tpu.core_type = #tpu.core_type<tc>, window_params = [{transform_indices = @transform_0, window_bounds = array<i64: 1, 8, 32>}, {pipeline_mode = #tpu.pipeline_mode<synchronous>, transform_indices = @transform_1, window_bounds = array<i64: 32, 384>}, {pipeline_mode = #tpu.pipeline_mode<synchronous>, transform_indices = @transform_2, window_bounds = array<i64: 1, 384>}, {transform_indices = @transform_3, window_bounds = array<i64: 1, 8, 32>}]} {
    %c0 = arith.constant 0 : index
    %c0_0 = arith.constant 0 : index
    %0 = vector.load %arg2[%c0, %c0_0] : memref<32x384xf32, #tpu.memory_space<vmem>>, vector<32x384xf32>
    %c0_1 = arith.constant 0 : index
    %c0_2 = arith.constant 0 : index
    %1 = vector.load %arg3[%c0_1, %c0_2] : memref<1x384xf32, #tpu.memory_space<vmem>>, vector<1x384xf32>
    %c0_3 = arith.constant 0 : index
    %c0_4 = arith.constant 0 : index
    %c0_5 = arith.constant 0 : index
    %2 = vector.load %arg1[%c0_3, %c0_4, %c0_5] : memref<1x8x32xf32, #tpu.memory_space<vmem>>, vector<1x8x32xf32>
    %3 = vector.shape_cast %2 : vector<1x8x32xf32> to vector<8x32xf32>
    %cst = arith.constant dense<0.000000e+00> : vector<8x384xf32>
    %4 = tpu.matmul %3, %0, %cst {dimension_numbers = #tpu.dot_dimension_numbers<[1], [0], [0], [1], [0, 0, 1, 1], [], []>} : vector<8x32xf32>, vector<32x384xf32>, vector<8x384xf32> -> vector<8x384xf32>
    %5 = vector.broadcast %1 : vector<1x384xf32> to vector<8x384xf32>
    %6 = arith.addf %4, %5 : vector<8x384xf32>
    %7 = vector.shape_cast %6 : vector<8x384xf32> to vector<1x8x384xf32>
    %8 = vector.extract_strided_slice %7 {offsets = [0, 0, 0], sizes = [1, 8, 128], strides = [1, 1, 1]} : vector<1x8x384xf32> to vector<1x8x128xf32>
    %9 = vector.extract_strided_slice %7 {offsets = [0, 0, 128], sizes = [1, 8, 128], strides = [1, 1, 1]} : vector<1x8x384xf32> to vector<1x8x128xf32>
    %10 = vector.extract_strided_slice %7 {offsets = [0, 0, 256], sizes = [1, 8, 128], strides = [1, 1, 1]} : vector<1x8x384xf32> to vector<1x8x128xf32>
    "tpu.trace_start"() <{level = 10 : i32, message = "bqd,bkd->bqk"}> : () -> ()
    %cst_6 = arith.constant dense<0.000000e+00> : vector<1x8x8xf32>
    %11 = tpu.matmul %8, %9, %cst_6 {dimension_numbers = #tpu.dot_dimension_numbers<[2], [2], [1], [1], [0, 0, 0, 1, 1, 1], [0], [0]>} : vector<1x8x128xf32>, vector<1x8x128xf32>, vector<1x8x8xf32> -> vector<1x8x8xf32>
    "tpu.trace_stop"() : () -> ()
    %cst_7 = arith.constant dense<0xFF800000> : vector<1x8xf32>
    %12 = vector.multi_reduction <maximumf>, %11, %cst_7 [2] : vector<1x8x8xf32> to vector<1x8xf32>
    %13 = vector.shape_cast %12 : vector<1x8xf32> to vector<1x8x1xf32>
    %14 = vector.broadcast %13 : vector<1x8x1xf32> to vector<1x8x8xf32>
    %15 = arith.subf %11, %14 : vector<1x8x8xf32>
    %16 = math.exp %15 : vector<1x8x8xf32>
    %cst_8 = arith.constant dense<0.000000e+00> : vector<1x8xf32>
    %17 = vector.multi_reduction <add>, %16, %cst_8 [2] : vector<1x8x8xf32> to vector<1x8xf32>
    %18 = vector.shape_cast %17 : vector<1x8xf32> to vector<1x8x1xf32>
    %19 = tpu.reciprocal %18 {approx = true} : vector<1x8x1xf32> -> vector<1x8x1xf32>
    %20 = vector.broadcast %19 : vector<1x8x1xf32> to vector<1x8x8xf32>
    %21 = arith.mulf %16, %20 : vector<1x8x8xf32>
    "tpu.trace_start"() <{level = 10 : i32, message = "bqk,bkd->bqd"}> : () -> ()
    %cst_9 = arith.constant dense<0.000000e+00> : vector<1x8x128xf32>
    %22 = tpu.matmul %21, %10, %cst_9 {dimension_numbers = #tpu.dot_dimension_numbers<[2], [1], [1], [2], [0, 0, 0, 1, 1, 2], [0], [0]>} : vector<1x8x8xf32>, vector<1x8x128xf32>, vector<1x8x128xf32> -> vector<1x8x128xf32>
    "tpu.trace_stop"() : () -> ()
    %23 = vector.extract_strided_slice %22 {offsets = [0, 0, 0], sizes = [1, 8, 32], strides = [1, 1, 1]} : vector<1x8x128xf32> to vector<1x8x32xf32>
    %c0_10 = arith.constant 0 : index
    %c0_11 = arith.constant 0 : index
    %c0_12 = arith.constant 0 : index
    %24 = vector.load %arg4[%c0_10, %c0_11, %c0_12] : memref<1x8x32xf32, #tpu.memory_space<vmem>>, vector<1x8x32xf32>
    tpu.vector_store %arg4[%c0_10, %c0_11, %c0_12], %23 {strides = array<i32>} : memref<1x8x32xf32, #tpu.memory_space<vmem>>, vector<1x8x32xf32>,
    return
  }
  func.func @transform_0(%arg0: i32) -> (i32, i32, i32) {
    %c0_i32 = arith.constant 0 : i32
    %c0_i32_0 = arith.constant 0 : i32
    %c0_i32_1 = arith.constant 0 : i32
    return %arg0, %c0_i32, %c0_i32_0 : i32, i32, i32
  }
  func.func @transform_1(%arg0: i32) -> (i32, i32) {
    %c0_i32 = arith.constant 0 : i32
    %c0_i32_0 = arith.constant 0 : i32
    %c0_i32_1 = arith.constant 0 : i32
    return %c0_i32, %c0_i32_0 : i32, i32
  }
  func.func @transform_2(%arg0: i32) -> (i32, i32) {
    %c0_i32 = arith.constant 0 : i32
    %c0_i32_0 = arith.constant 0 : i32
    %c0_i32_1 = arith.constant 0 : i32
    return %c0_i32, %c0_i32_0 : i32, i32
  }
  func.func @transform_3(%arg0: i32) -> (i32, i32, i32) {
    %c0_i32 = arith.constant 0 : i32
    %c0_i32_0 = arith.constant 0 : i32
    %c0_i32_1 = arith.constant 0 : i32
    return %arg0, %c0_i32, %c0_i32_0 : i32, i32, i32
  }
}

</mosaic_0001>

<llo_original>
// kernel: tpu_custom_call.1
$region0: #{tpu_custom_call.1}
  #allocation0 [shape = 'u32[]', space=smem, size = 0x4, offset = 0x4, fixed_abs, tag = 'smem constant byte address 0x4 - core index']
  #allocation1 [shape = 'u32[144,128]{1,0:T(1,128)}', space=vmem, size = 0x12000, scoped, tag = 'internal scratch']
  %s0 = inlined_call_operand.hbm [shape: f32[2,8,32], index: 0, kind: input, shape index: {}]
  %s1 = inlined_call_operand.hbm [shape: f32[32,384], index: 1, kind: input, shape index: {}]
  %s2 = inlined_call_operand.vmem [shape: f32[1,384], index: 2, kind: input, shape index: {}]
  %s3 = inlined_call_operand.hbm [shape: f32[2,8,32], index: 3, kind: output, shape index: {}]
  %s4 = sld [smem:[#allocation0]]
  $region53: #{tpu_custom_call.1} parent=0
    _
  %s6 = ssub.s32 1, %s4
  %s7 = scalar_select 0, %s6, %s4
  $region1: #{tpu_custom_call.1} parent=0
    #allocation2 [shape = 'u8[8192]{0}', space=vmem, size = 0x2000, scoped, tag = 'input window, operand 0']
    #allocation3 [shape = 's32[2]{0}', space=sflag, size = 0x8, scoped, tag = 'scoped memory for tpu_custom_call.1']
    #allocation4 [shape = 's32[2]{0}', space=sflag, size = 0x8, scoped, tag = 'scoped memory for tpu_custom_call.1']
    #allocation5 [shape = 'u8[49152]{0}', space=vmem, size = 0xc000, scoped, tag = 'input window, operand 1, single buffered']
    #allocation6 [shape = 's32[1]{0}', space=sflag, size = 0x4, scoped, tag = 'scoped memory for tpu_custom_call.1']
    #allocation7 [shape = 'u8[8192]{0}', space=vmem, size = 0x2000, scoped, tag = 'output window, operand 0']
    %8 = vsyncpa [#allocation3], 0
    %s9 = scalar_lea.sflag [#allocation3], 1
    %10 = vsyncpa %s9, 0
    %11 = vsyncpa [#allocation6], 0
    %12 = vsyncpa [#allocation4], 0
    %s13 = scalar_lea.sflag [#allocation4], 1
    %14 = vsyncpa %s13, 0
    loop: start=0, step=1, limit=4
    $region2: #{tpu_custom_call.1} parent=1 // loop_pre_header
      _
    $region3: #{tpu_custom_call.1} parent=1 // loop_header
      %s16 = sphi 0, %s20
      %p17 = scmp.ge.s32.totalorder %s16, 4
      %s26 = sphi 0, %s28
      %s29 = sphi 0, %s26
      %s30 = sphi 0, %s29
      %s46 = sphi 0, %s30
      %s50 = sphi 0, %s50
      %s52 = sphi 0, %s50
      %s53 = sphi 0, %s52
      %s67 = sphi 0, %s53
      %s71 = sphi 0, %s71
      %s73 = sphi 0, %s71
      %s74 = sphi 0, %s73
      %s88 = sphi 0, %s74
      %s94 = sphi 0, %s96
      %s97 = sphi 0, %s94
      %s98 = sphi 0, %s97
      %s114 = sphi 0, %s98
    $region4: #{tpu_custom_call.1} parent=1 // loop_header_branch
      %19 = sbr.rel (%p17) target = $region8
    $region5: #{tpu_custom_call.1} parent=1 // loop_body
      %s21 = ssub.s32 %s16, 1
      %s22 = ssub.s32 %s16, 2
      %s23 = sadd.s32 %s16, 1
      %s24 = ssub.s32 %s16, %s23
      %p25 = scmp.eq.s32.totalorder %s24, 0
      %s27 = sadd.s32 %s26, 1
      %s28 = scalar_select %p25, %s26, %s27
      %p31 = pneg %p25
      %p32 = scmp.eq.s32.totalorder %s16, 1
      %p33 = por %p31, %p32
      %p34 = scmp.ne.s32.totalorder %s26, %s29
      %p35 = scmp.eq.s32.totalorder %s16, 0
      %p36 = por %p34, %p35
      %p37 = scmp.ne.s32.totalorder %s26, %s29
      %p38 = scmp.eq.s32.totalorder %s21, 1
      %p39 = por %p37, %p38
      %p40 = scmp.ne.s32.totalorder %s29, %s30
      %p41 = scmp.eq.s32.totalorder %s21, 0
      %p42 = por %p40, %p41
      %p43 = scmp.ne.s32.totalorder %s29, %s30
      %p44 = scmp.eq.s32.totalorder %s22, 1
      %p45 = por %p43, %p44
      %p47 = scmp.ne.s32.totalorder %s30, %s46
      %p48 = scmp.eq.s32.totalorder %s22, 0
      %p49 = por %p47, %p48
      %s51 = sadd.s32 %s50, 1
      %p54 = scmp.eq.s32.totalorder %s16, 1
      %p55 = scmp.ne.s32.totalorder %s50, %s52
      %p56 = scmp.eq.s32.totalorder %s16, 0
      %p57 = por %p55, %p56
      %p58 = scmp.ne.s32.totalorder %s50, %s52
      %p59 = scmp.eq.s32.totalorder %s21, 1
      %p60 = por %p58, %p59
      %p61 = scmp.ne.s32.totalorder %s52, %s53
      %p62 = scmp.eq.s32.totalorder %s21, 0
      %p63 = por %p61, %p62
      %p64 = scmp.ne.s32.totalorder %s52, %s53
      %p65 = scmp.eq.s32.totalorder %s22, 1
      %p66 = por %p64, %p65
      %p68 = scmp.ne.s32.totalorder %s53, %s67
      %p69 = scmp.eq.s32.totalorder %s22, 0
      %p70 = por %p68, %p69
      %s72 = sadd.s32 %s71, 1
      %p75 = scmp.eq.s32.totalorder %s16, 1
      %p76 = scmp.ne.s32.totalorder %s71, %s73
      %p77 = scmp.eq.s32.totalorder %s16, 0
      %p78 = por %p76, %p77
      %p79 = scmp.ne.s32.totalorder %s71, %s73
      %p80 = scmp.eq.s32.totalorder %s21, 1
      %p81 = por %p79, %p80
      %p82 = scmp.ne.s32.totalorder %s73, %s74
      %p83 = scmp.eq.s32.totalorder %s21, 0
      %p84 = por %p82, %p83
      %p85 = scmp.ne.s32.totalorder %s73, %s74
      %p86 = scmp.eq.s32.totalorder %s22, 1
      %p87 = por %p85, %p86
      %p89 = scmp.ne.s32.totalorder %s74, %s88
      %p90 = scmp.eq.s32.totalorder %s22, 0
      %p91 = por %p89, %p90
      %s92 = ssub.s32 %s16, %s23
      %p93 = scmp.eq.s32.totalorder %s92, 0
      %s95 = sadd.s32 %s94, 1
      %s96 = scalar_select %p93, %s94, %s95
      %p99 = pneg %p93
      %p100 = scmp.eq.s32.totalorder %s16, 1
      %p101 = por %p99, %p100
      %p102 = scmp.ne.s32.totalorder %s94, %s97
      %p103 = scmp.eq.s32.totalorder %s16, 0
      %p104 = por %p102, %p103
      %p105 = scmp.ne.s32.totalorder %s94, %s97
      %p106 = scmp.eq.s32.totalorder %s21, 1
      %p107 = por %p105, %p106
      %p108 = scmp.ne.s32.totalorder %s97, %s98
      %p109 = scmp.eq.s32.totalorder %s21, 0
      %p110 = por %p108, %p109
      %p111 = scmp.ne.s32.totalorder %s97, %s98
      %p112 = scmp.eq.s32.totalorder %s22, 1
      %p113 = por %p111, %p112
      %p115 = scmp.ne.s32.totalorder %s98, %s114
      %p116 = scmp.eq.s32.totalorder %s22, 0
      %p117 = por %p115, %p116
      %p118 = scmp.le.s32.totalorder 1, %s16
      %p119 = scmp.lt.s32.totalorder %s16, 3
      %p120 = pnand %p118, %p119
      %p121 = pneg %p120
      // Predicated region
      $region9: #{tpu_custom_call.1} parent=5 // pred_check
        _
      $region10: #{tpu_custom_call.1} parent=5 // pred_check_branch
        %123 = sbr.rel (%p120) target = $region12
      $region11: #{tpu_custom_call.1} parent=5 // pred_region
        %s124 = ssub.s32 %s16, 1
        // Predicated region
        $region13: #{tpu_custom_call.1} parent=11 // pred_check
          %p125 = pneg %p63
        $region14: #{tpu_custom_call.1} parent=11 // pred_check_branch
          %127 = sbr.rel (%p125) target = $region16
        $region15: #{tpu_custom_call.1} parent=11 // pred_region
          %s129 = ssub.s32 1536, 1536
          %130 = vsyncadd [#allocation6], %s129
          %s131 = sshll.u32 [#allocation5], 4
          %s132 = int_to_ptr.vmem [resolvable:$true] %s131
          %137 = dma.hbm_to_vmem [thread:$0]  %s1, 1536, %s132, [#allocation6], 384, 384, 24
        $region16: #{tpu_custom_call.1} parent=11 // pred_fallthru
          _
        // Predicated region
        $region17: #{tpu_custom_call.1} parent=11 // pred_check
          %p138 = pneg %p84
        $region18: #{tpu_custom_call.1} parent=11 // pred_check_branch
          %140 = sbr.rel (%p138) target = $region20
        $region19: #{tpu_custom_call.1} parent=11 // pred_region
          _
        $region20: #{tpu_custom_call.1} parent=11 // pred_fallthru
          _
      $region12: #{tpu_custom_call.1} parent=5 // pred_fallthru
        _
      %p141 = scmp.lt.s32.totalorder %s16, 2
      // Predicated region
      $region21: #{tpu_custom_call.1} parent=5 // pred_check
        %p142 = pneg %p141
      $region22: #{tpu_custom_call.1} parent=5 // pred_check_branch
        %144 = sbr.rel (%p142) target = $region24
      $region23: #{tpu_custom_call.1} parent=5 // pred_region
        // Predicated region
        $region25: #{tpu_custom_call.1} parent=23 // pred_check
          %p145 = pneg %p36
        $region26: #{tpu_custom_call.1} parent=23 // pred_check_branch
          %147 = sbr.rel (%p145) target = $region28
        $region27: #{tpu_custom_call.1} parent=23 // pred_region
          %s148 = sand.u32 %s26, 1
          %s149 = scalar_lea.sflag [#allocation3], %s148
          %s150 = sand.u32 %s26, 1
          %s151 = smul.addr %s150, 8
          %s152 = scalar_lea.vmem [#allocation2], %s151
          %s154 = ssub.s32 128, 128
          %155 = vsyncadd %s149, %s154
          %s156 = smul.addr %s16, 128
          %s157 = scalar_lea.hbm %s0, %s156
          %s159 = sshll.u32 %s152, 4
          %s160 = int_to_ptr.vmem [resolvable:$true] %s159
          %162 = dma.hbm_to_vmem [thread:$0]  %s157, 128, %s160, %s149
        $region28: #{tpu_custom_call.1} parent=23 // pred_fallthru
          _
      $region24: #{tpu_custom_call.1} parent=5 // pred_fallthru
        _
      %p163 = scmp.le.s32.totalorder 1, %s16
      %p164 = scmp.lt.s32.totalorder %s16, 3
      %p165 = pnand %p163, %p164
      %p166 = pneg %p165
      // Predicated region
      $region29: #{tpu_custom_call.1} parent=5 // pred_check
        _
      $region30: #{tpu_custom_call.1} parent=5 // pred_check_branch
        %168 = sbr.rel (%p165) target = $region32
      $region31: #{tpu_custom_call.1} parent=5 // pred_region
        %s169 = ssub.s32 %s16, 1
        %s170 = sand.u32 %s29, 1
        %s171 = scalar_lea.sflag [#allocation3], %s170
        %s172 = sand.u32 %s29, 1
        %s173 = smul.addr %s172, 8
        %s174 = scalar_lea.vmem [#allocation2], %s173
        // Predicated region
        $region33: #{tpu_custom_call.1} parent=31 // pred_check
          %p175 = pneg %p42
        $region34: #{tpu_custom_call.1} parent=31 // pred_check_branch
          %177 = sbr.rel (%p175) target = $region36
        $region35: #{tpu_custom_call.1} parent=31 // pred_region
          %178 = dma.done %s171, 128
        $region36: #{tpu_custom_call.1} parent=31 // pred_fallthru
          _
        // Predicated region
        $region37: #{tpu_custom_call.1} parent=31 // pred_check
          %p179 = pneg %p63
        $region38: #{tpu_custom_call.1} parent=31 // pred_check_branch
          %181 = sbr.rel (%p179) target = $region40
        $region39: #{tpu_custom_call.1} parent=31 // pred_region
          %182 = dma.done [#allocation6], 1536
        $region40: #{tpu_custom_call.1} parent=31 // pred_fallthru
          _
        %s183 = sand.u32 %s29, 1
        %s184 = scalar_lea.sflag [#allocation3], %s183
        %s185 = sand.u32 %s29, 1
        %s186 = smul.addr %s185, 8
        %s187 = scalar_lea.vmem [#allocation2], %s186
        %p188 = pneg %p42
        %p189 = pneg %p39
        %p190 = pneg %p63
        %p191 = pneg %p60
        %p192 = pneg %p84
        %p193 = pneg %p81
        %p194 = pneg %p110
        %p195 = pneg %p107
        %s196 = sand.u32 %s97, 1
        %s197 = scalar_lea.sflag [#allocation4], %s196
        %s198 = sand.u32 %s97, 1
        %s199 = smul.addr %s198, 8
        %s200 = scalar_lea.vmem [#allocation7], %s199
        %v201 = vld [vmem:[#allocation5] sm:$0xff]
        %v202 = vld [vmem:[#allocation5 + $0x8] sm:$0xff]
        %v203 = vld [vmem:[#allocation5 + $0x10] sm:$0xff]
        %v204 = vld [vmem:[#allocation5 + $0x18] sm:$0xff]
        %v205 = vld [vmem:[#allocation5 + $0x20] sm:$0xff]
        %v206 = vld [vmem:[#allocation5 + $0x28] sm:$0xff]
        %v207 = vld [vmem:[#allocation5 + $0x30] sm:$0xff]
        %v208 = vld [vmem:[#allocation5 + $0x38] sm:$0xff]
        %v209 = vld [vmem:[#allocation5 + $0x40] sm:$0xff]
        %v210 = vld [vmem:[#allocation5 + $0x48] sm:$0xff]
        %v211 = vld [vmem:[#allocation5 + $0x50] sm:$0xff]
        %v212 = vld [vmem:[#allocation5 + $0x58] sm:$0xff]
        %v213 = vld [vmem:[%s2] sm:$0x7]
        %v214 = vld [vmem:[%s174] sm:$0xff]
        %v216 = vlaneseq
        %v217 = vshrl.u32 %v216, 7
        %v218 = vsub.s32 0, %v217
        %v219 = vrot.slane %v213, %v218
        %v220 = vlaneseq
        %v221 = vshrl.u32 %v220, 7
        %v222 = vsub.s32 1, %v221
        %v223 = vrot.slane %v213, %v222
        %v224 = vlaneseq
        %v225 = vshrl.u32 %v224, 7
        %v226 = vsub.s32 2, %v225
        %v227 = vrot.slane %v213, %v226
        %vm231 = vcmask 261120
        %v233 = vsel %vm231, %v214, 0
        %235 = vmatprep.subr.mxu0 %v202
        %236 = vmatpush1.msra.mxu0 %v201
        %237 = vmatprep.subr.mxu0 %v205
        %238 = vmatpush1.msra.mxu0 %v204
        %239 = vmatprep.subr.mxu0 %v208
        %240 = vmatpush1.msra.mxu0 %v207
        %241 = vmatprep.subr.mxu0 %v211
        %242 = vmatpush1.msra.mxu0 %v210
        %243 = vmatprep.subr.mxu0 0.0
        %244 = vmatpush1.msra.mxu0 0.0
        %245 = vmatprep.subr.mxu0 0.0
        %246 = vmatpush1.msra.mxu0 0.0
        %247 = vmatprep.subr.mxu0 0.0
        %248 = vmatpush1.msra.mxu0 0.0
        %249 = vmatprep.subr.mxu0 0.0
        %250 = vmatpush1.msra.mxu0 0.0
        %251 = vmatprep.subr.mxu0 0.0
        %252 = vmatpush1.msra.mxu0 0.0
        %253 = vmatprep.subr.mxu0 0.0
        %254 = vmatpush1.msra.mxu0 0.0
        %255 = vmatprep.subr.mxu0 0.0
        %256 = vmatpush1.msra.mxu0 0.0
        %257 = vmatprep.subr.mxu0 0.0
        %258 = vmatpush1.msra.mxu0 0.0
        %259 = vmatprep.subr.mxu0 0.0
        %260 = vmatpush1.msra.mxu0 0.0
        %261 = vmatprep.subr.mxu0 0.0
        %262 = vmatpush1.msra.mxu0 0.0
        %263 = vmatprep.subr.mxu0 0.0
        %264 = vmatpush1.msra.mxu0 0.0
        %265 = vmatprep.subr.mxu0 0.0
        %266 = vmatpush1.msra.mxu0 0.0
        %267 = vmatprep.subr.mxu0 0.0
        %268 = vmatpush1.msra.mxu0 0.0
        %269 = vmatprep.subr.mxu0 0.0
        %270 = vmatpush1.msra.mxu0 0.0
        %271 = vmatprep.subr.mxu0 0.0
        %272 = vmatpush1.msra.mxu0 0.0
        %273 = vmatprep.subr.mxu0 0.0
        %274 = vmatpush1.msra.mxu0 0.0
        %275 = vmatprep.subr.mxu0 0.0
        %276 = vmatpush1.msra.mxu0 0.0
        %277 = vmatprep.subr.mxu0 0.0
        %278 = vmatpush1.msra.mxu0 0.0
        %279 = vmatprep.subr.mxu0 0.0
        %280 = vmatpush1.msra.mxu0 0.0
        %281 = vmatprep.subr.mxu0 0.0
        %282 = vmatpush1.msra.mxu0 0.0
        %283 = vmatprep.subr.mxu0 0.0
        %284 = vmatpush1.msra.mxu0 0.0
        %285 = vmatprep.subr.mxu0 0.0
        %286 = vmatpush1.msra.mxu0 0.0
        %287 = vmatprep.subr.mxu0 0.0
        %288 = vmatpush1.msra.mxu0 0.0
        %289 = vmatprep.subr.mxu0 0.0
        %290 = vmatpush1.msra.mxu0 0.0
        %291 = vmatprep.subr.mxu0 0.0
        %292 = vmatpush1.msra.mxu0 0.0
        %293 = vmatprep.subr.mxu0 0.0
        %294 = vmatpush1.msra.mxu0 0.0
        %295 = vmatprep.subr.mxu0 0.0
        %296 = vmatpush1.msra.mxu0 0.0
        %297 = vmatprep.subr.mxu0 0.0
        %298 = vmatpush1.msra.mxu0 0.0
        %299 = vmatprep.mubr.f32.mxu0 0.0
        %300 = vmatmul.mubr.f32.gmra.mrb[0].mxu0 %v233
        %v301 = vpop.f32.mrb[0].mxu0
        %v302 = vadd.f32 %v219, %v301
        %v303 = vpop.f32.mrb[0].mxu0
        %v304 = vadd.f32 %v223, %v303
        %305 = vdwg.mxu0
        %306 = vmatprep.subr.mxu0 0.0
        %307 = vmatpush1.msra.mxu0 %v203
        %308 = vmatprep.subr.mxu0 0.0
        %309 = vmatpush1.msra.mxu0 %v206
        %310 = vmatprep.subr.mxu0 0.0
        %311 = vmatpush1.msra.mxu0 %v209
        %312 = vmatprep.subr.mxu0 0.0
        %313 = vmatpush1.msra.mxu0 %v212
        %314 = vmatprep.subr.mxu0 0.0
        %315 = vmatpush1.msra.mxu0 0.0
        %316 = vmatprep.subr.mxu0 0.0
        %317 = vmatpush1.msra.mxu0 0.0
        %318 = vmatprep.subr.mxu0 0.0
        %319 = vmatpush1.msra.mxu0 0.0
        %320 = vmatprep.subr.mxu0 0.0
        %321 = vmatpush1.msra.mxu0 0.0
        %322 = vmatprep.subr.mxu0 0.0
        %323 = vmatpush1.msra.mxu0 0.0
        %324 = vmatprep.subr.mxu0 0.0
        %325 = vmatpush1.msra.mxu0 0.0
        %326 = vmatprep.subr.mxu0 0.0
        %327 = vmatpush1.msra.mxu0 0.0
        %328 = vmatprep.subr.mxu0 0.0
        %329 = vmatpush1.msra.mxu0 0.0
        %330 = vmatprep.subr.mxu0 0.0
        %331 = vmatpush1.msra.mxu0 0.0
        %332 = vmatprep.subr.mxu0 0.0
        %333 = vmatpush1.msra.mxu0 0.0
        %334 = vmatprep.subr.mxu0 0.0
        %335 = vmatpush1.msra.mxu0 0.0
        %336 = vmatprep.subr.mxu0 0.0
        %337 = vmatpush1.msra.mxu0 0.0
        %338 = vmatprep.subr.mxu0 0.0
        %339 = vmatpush1.msra.mxu0 0.0
        %340 = vmatprep.subr.mxu0 0.0
        %341 = vmatpush1.msra.mxu0 0.0
        %342 = vmatprep.subr.mxu0 0.0
        %343 = vmatpush1.msra.mxu0 0.0
        %344 = vmatprep.subr.mxu0 0.0
        %345 = vmatpush1.msra.mxu0 0.0
        %346 = vmatprep.subr.mxu0 0.0
        %347 = vmatpush1.msra.mxu0 0.0
        %348 = vmatprep.subr.mxu0 0.0
        %349 = vmatpush1.msra.mxu0 0.0
        %350 = vmatprep.subr.mxu0 0.0
        %351 = vmatpush1.msra.mxu0 0.0
        %352 = vmatprep.subr.mxu0 0.0
        %353 = vmatpush1.msra.mxu0 0.0
        %354 = vmatprep.subr.mxu0 0.0
        %355 = vmatpush1.msra.mxu0 0.0
        %356 = vmatprep.subr.mxu0 0.0
        %357 = vmatpush1.msra.mxu0 0.0
        %358 = vmatprep.subr.mxu0 0.0
        %359 = vmatpush1.msra.mxu0 0.0
        %360 = vmatprep.subr.mxu0 0.0
        %361 = vmatpush1.msra.mxu0 0.0
        %362 = vmatprep.subr.mxu0 0.0
        %363 = vmatpush1.msra.mxu0 0.0
        %364 = vmatprep.subr.mxu0 0.0
        %365 = vmatpush1.msra.mxu0 0.0
        %366 = vmatprep.subr.mxu0 0.0
        %367 = vmatpush1.msra.mxu0 0.0
        %368 = vmatprep.subr.mxu0 0.0
        %369 = vmatpush1.msra.mxu0 0.0
        %370 = vmatprep.mubr.f32.mxu0 0.0
        %371 = vmatmul.mubr.f32.gmra.mrb[0].mxu0 %v233
        %v372 = vpop.f32.mrb[0].mxu0
        %v373 = vadd.f32 %v227, %v372
        %v374 = vpop.f32.mrb[0].mxu0
        %375 = vdwg.mxu0
        %376 = vmatprep.subr.mxu0 0.0
        %377 = vmatpush1.xpose.msra.mxu0 %v304
        %378 = vmatprep.subr.mxu0 0.0
        %379 = vmatpush1.xpose.msra.mxu0 0.0
        %380 = vmatprep.subr.mxu0 0.0
        %381 = vmatpush1.xpose.msra.mxu0 0.0
        %382 = vmatprep.subr.mxu0 0.0
        %383 = vmatpush1.xpose.msra.mxu0 0.0
        %384 = vmatprep.subr.mxu0 0.0
        %385 = vmatpush1.xpose.msra.mxu0 0.0
        %386 = vmatprep.subr.mxu0 0.0
        %387 = vmatpush1.xpose.msra.mxu0 0.0
        %388 = vmatprep.subr.mxu0 0.0
        %389 = vmatpush1.xpose.msra.mxu0 0.0
        %390 = vmatprep.subr.mxu0 0.0
        %391 = vmatpush1.xpose.msra.mxu0 0.0
        %392 = vmatprep.subr.mxu0 0.0
        %393 = vmatpush1.xpose.msra.mxu0 0.0
        %394 = vmatprep.subr.mxu0 0.0
        %395 = vmatpush1.xpose.msra.mxu0 0.0
        %396 = vmatprep.subr.mxu0 0.0
        %397 = vmatpush1.xpose.msra.mxu0 0.0
        %398 = vmatprep.subr.mxu0 0.0
        %399 = vmatpush1.xpose.msra.mxu0 0.0
        %400 = vmatprep.subr.mxu0 0.0
        %401 = vmatpush1.xpose.msra.mxu0 0.0
        %402 = vmatprep.subr.mxu0 0.0
        %403 = vmatpush1.xpose.msra.mxu0 0.0
        %404 = vmatprep.subr.mxu0 0.0
        %405 = vmatpush1.xpose.msra.mxu0 0.0
        %406 = vmatprep.subr.mxu0 0.0
        %407 = vmatpush1.xpose.msra.mxu0 0.0
        %408 = vmatprep.subr.mxu0 0.0
        %409 = vmatpush1.xpose.msra.mxu0 0.0
        %410 = vmatprep.subr.mxu0 0.0
        %411 = vmatpush1.xpose.msra.mxu0 0.0
        %412 = vmatprep.subr.mxu0 0.0
        %413 = vmatpush1.xpose.msra.mxu0 0.0
        %414 = vmatprep.subr.mxu0 0.0
        %415 = vmatpush1.xpose.msra.mxu0 0.0
        %416 = vmatprep.subr.mxu0 0.0
        %417 = vmatpush1.xpose.msra.mxu0 0.0
        %418 = vmatprep.subr.mxu0 0.0
        %419 = vmatpush1.xpose.msra.mxu0 0.0
        %420 = vmatprep.subr.mxu0 0.0
        %421 = vmatpush1.xpose.msra.mxu0 0.0
        %422 = vmatprep.subr.mxu0 0.0
        %423 = vmatpush1.xpose.msra.mxu0 0.0
        %424 = vmatprep.subr.mxu0 0.0
        %425 = vmatpush1.xpose.msra.mxu0 0.0
        %426 = vmatprep.subr.mxu0 0.0
        %427 = vmatpush1.xpose.msra.mxu0 0.0
        %428 = vmatprep.subr.mxu0 0.0
        %429 = vmatpush1.xpose.msra.mxu0 0.0
        %430 = vmatprep.subr.mxu0 0.0
        %431 = vmatpush1.xpose.msra.mxu0 0.0
        %432 = vmatprep.subr.mxu0 0.0
        %433 = vmatpush1.xpose.msra.mxu0 0.0
        %434 = vmatprep.subr.mxu0 0.0
        %435 = vmatpush1.xpose.msra.mxu0 0.0
        %436 = vmatprep.subr.mxu0 0.0
        %437 = vmatpush1.xpose.msra.mxu0 0.0
        %438 = vmatprep.subr.mxu0 0.0
        %439 = vmatpush1.xpose.msra.mxu0 0.0
        %440 = vmatprep.mubr.f32.mxu0 0.0
        %441 = vmatmul.mubr.f32.gmra.mrb[0].mxu0 %v302
        %v442 = vpop.f32.mrb[0].mxu0
        %v443 = vadd.f32 0.0, %v442
        %v444 = vpop.f32.mrb[0].mxu0
        %445 = vdwg.mxu0
        %vm446 = vcmask 64512
        %v447 = vsel %vm446, %v443, -inf
        %448 = vmax.xlane.f32.xlu0 %v447
        %v449 = vpop.xlane.xlu0 %448
        %v450 = vsub.f32 %v443, %v449
        %v451 = vmul.f32 %v450, 1.442695
        %v452 = vpow.pop %v451
        %v453 = vsel %vm446, %v452, 0.0
        %454 = vadd.xlane.f32.xlu0 %v453
        %v455 = vpop.xlane.xlu0 %454
        %v456 = vrcp.pop %v455
        %v457 = vmul.f32 %v452, %v456
        %v459 = vsel %vm446, %v457, 0
        %461 = vmatprep.subr.mxu0 0.0
        %462 = vmatpush1.msra.mxu0 %v373
        %463 = vmatprep.subr.mxu0 0.0
        %464 = vmatpush1.msra.mxu0 0.0
        %465 = vmatprep.subr.mxu0 0.0
        %466 = vmatpush1.msra.mxu0 0.0
        %467 = vmatprep.subr.mxu0 0.0
        %468 = vmatpush1.msra.mxu0 0.0
        %469 = vmatprep.subr.mxu0 0.0
        %470 = vmatpush1.msra.mxu0 0.0
        %471 = vmatprep.subr.mxu0 0.0
        %472 = vmatpush1.msra.mxu0 0.0
        %473 = vmatprep.subr.mxu0 0.0
        %474 = vmatpush1.msra.mxu0 0.0
        %475 = vmatprep.subr.mxu0 0.0
        %476 = vmatpush1.msra.mxu0 0.0
        %477 = vmatprep.subr.mxu0 0.0
        %478 = vmatpush1.msra.mxu0 0.0
        %479 = vmatprep.subr.mxu0 0.0
        %480 = vmatpush1.msra.mxu0 0.0
        %481 = vmatprep.subr.mxu0 0.0
        %482 = vmatpush1.msra.mxu0 0.0
        %483 = vmatprep.subr.mxu0 0.0
        %484 = vmatpush1.msra.mxu0 0.0
        %485 = vmatprep.subr.mxu0 0.0
        %486 = vmatpush1.msra.mxu0 0.0
        %487 = vmatprep.subr.mxu0 0.0
        %488 = vmatpush1.msra.mxu0 0.0
        %489 = vmatprep.subr.mxu0 0.0
        %490 = vmatpush1.msra.mxu0 0.0
        %491 = vmatprep.subr.mxu0 0.0
        %492 = vmatpush1.msra.mxu0 0.0
        %493 = vmatprep.subr.mxu0 0.0
        %494 = vmatpush1.msra.mxu0 0.0
        %495 = vmatprep.subr.mxu0 0.0
        %496 = vmatpush1.msra.mxu0 0.0
        %497 = vmatprep.subr.mxu0 0.0
        %498 = vmatpush1.msra.mxu0 0.0
        %499 = vmatprep.subr.mxu0 0.0
        %500 = vmatpush1.msra.mxu0 0.0
        %501 = vmatprep.subr.mxu0 0.0
        %502 = vmatpush1.msra.mxu0 0.0
        %503 = vmatprep.subr.mxu0 0.0
        %504 = vmatpush1.msra.mxu0 0.0
        %505 = vmatprep.subr.mxu0 0.0
        %506 = vmatpush1.msra.mxu0 0.0
        %507 = vmatprep.subr.mxu0 0.0
        %508 = vmatpush1.msra.mxu0 0.0
        %509 = vmatprep.subr.mxu0 0.0
        %510 = vmatpush1.msra.mxu0 0.0
        %511 = vmatprep.subr.mxu0 0.0
        %512 = vmatpush1.msra.mxu0 0.0
        %513 = vmatprep.subr.mxu0 0.0
        %514 = vmatpush1.msra.mxu0 0.0
        %515 = vmatprep.subr.mxu0 0.0
        %516 = vmatpush1.msra.mxu0 0.0
        %517 = vmatprep.subr.mxu0 0.0
        %518 = vmatpush1.msra.mxu0 0.0
        %519 = vmatprep.subr.mxu0 0.0
        %520 = vmatpush1.msra.mxu0 0.0
        %521 = vmatprep.subr.mxu0 0.0
        %522 = vmatpush1.msra.mxu0 0.0
        %523 = vmatprep.subr.mxu0 0.0
        %524 = vmatpush1.msra.mxu0 0.0
        %525 = vmatprep.mubr.f32.mxu0 0.0
        %526 = vmatmul.mubr.f32.gmra.mrb[0].mxu0 %v459
        %v527 = vpop.f32.mrb[0].mxu0
        %v528 = vadd.f32 0.0, %v527
        %v529 = vpop.f32.mrb[0].mxu0
        %530 = vdwg.mxu0
        %531 = vst.msk [vmem:[%s200] sm:$0xff] %vm231, %v528
        %s532 = sand.u32 %s97, 1
        %s533 = scalar_lea.sflag [#allocation4], %s532
        %s534 = sand.u32 %s97, 1
        %s535 = smul.addr %s534, 8
        %s536 = scalar_lea.vmem [#allocation7], %s535
        // Predicated region
        $region41: #{tpu_custom_call.1} parent=31 // pred_check
          %p537 = pneg %p107
        $region42: #{tpu_custom_call.1} parent=31 // pred_check_branch
          %539 = sbr.rel (%p537) target = $region44
        $region43: #{tpu_custom_call.1} parent=31 // pred_region
          %s541 = ssub.s32 128, 128
          %542 = vsyncadd %s533, %s541
          %s543 = smul.addr %s21, 128
          %s544 = scalar_lea.hbm %s3, %s543
          %s546 = sshll.u32 %s536, 4
          %s547 = int_to_ptr.vmem [resolvable:$true] %s546
          %549 = dma.vmem_to_hbm [thread:$0]  %s547, 128, %s544, %s533
        $region44: #{tpu_custom_call.1} parent=31 // pred_fallthru
          _
      $region32: #{tpu_custom_call.1} parent=5 // pred_fallthru
        _
      %p550 = scmp.le.s32.totalorder 2, %s16
      // Predicated region
      $region45: #{tpu_custom_call.1} parent=5 // pred_check
        %p551 = pneg %p550
      $region46: #{tpu_custom_call.1} parent=5 // pred_check_branch
        %553 = sbr.rel (%p551) target = $region48
      $region47: #{tpu_custom_call.1} parent=5 // pred_region
        %s554 = ssub.s32 %s16, 2
        // Predicated region
        $region49: #{tpu_custom_call.1} parent=47 // pred_check
          %p555 = pneg %p113
        $region50: #{tpu_custom_call.1} parent=47 // pred_check_branch
          %557 = sbr.rel (%p555) target = $region52
        $region51: #{tpu_custom_call.1} parent=47 // pred_region
          %s558 = sand.u32 %s98, 1
          %s559 = scalar_lea.sflag [#allocation4], %s558
          %s560 = sand.u32 %s98, 1
          %s561 = smul.addr %s560, 8
          %s562 = scalar_lea.vmem [#allocation7], %s561
          %563 = dma.done %s559, 128
        $region52: #{tpu_custom_call.1} parent=47 // pred_fallthru
          _
      $region48: #{tpu_custom_call.1} parent=5 // pred_fallthru
        _
    $region6: #{tpu_custom_call.1} parent=1 // loop_footer
      %s20 = sadd.s32 1, %s16
    $region7: #{tpu_custom_call.1} parent=1 // loop_footer_branch
      %15 = sbr.rel target = $region3
    $region8: #{tpu_custom_call.1} parent=1 // loop_exit
      _
    %564 = vsyncpa [#allocation3], 1
    %s565 = scalar_lea.sflag [#allocation3], 1
    %566 = vsyncpa %s565, 1
    %567 = vsyncpa [#allocation6], 1
    %568 = vsyncpa [#allocation4], 1
    %s569 = scalar_lea.sflag [#allocation4], 1
    %570 = vsyncpa %s569, 1

</llo_original>
